<compile_context>
chip_gen: v7x
topology: tpu7x:2x2x1
jax: 0.10.0
libtpu: 0.0.40
codegen_flags: <defaults>
</compile_context>

<pallas_src>
import jax
import jax.numpy as jnp
from jax.experimental import pallas as pl
from jax.experimental.pallas import tpu as pltpu


def mlp_kernel(x_ref, w1_ref, b1_ref, w2_ref, b2_ref, w3_ref, o_ref):
    tb = x_ref.shape[0]
    in_dim = x_ref.shape[-1]

    # ---- fc1 + relu ----
    if in_dim <= 8:
        # K is tiny: do it on the VPU as broadcast multiply-adds instead of an
        # MXU matmul that would occupy only `in_dim` contraction rows.
        x = x_ref[...].astype(jnp.float32)      # (tb, in_dim)
        w1 = w1_ref[...].astype(jnp.float32)    # (in_dim, H)
        h1 = x[:, 0:1] * w1[0:1, :] + b1_ref[...]
        for k in range(1, in_dim):
            h1 = h1 + x[:, k:k + 1] * w1[k:k + 1, :]
    else:
        h1 = jnp.dot(x_ref[...], w1_ref[...],
                     preferred_element_type=jnp.float32) + b1_ref[...]
    h1 = jnp.maximum(h1, 0.0)

    # ---- fc2 + relu (MXU, f32 accumulation) ----
    h2 = jnp.dot(h1.astype(w2_ref.dtype), w2_ref[...],
                 preferred_element_type=jnp.float32)
    h2 = jnp.maximum(h2 + b2_ref[...], 0.0)

    # ---- fc3 (output columns zero-padded to 128 => unmasked lane-dense store) ----
    o = jnp.dot(h2.astype(w3_ref.dtype), w3_ref[...],
                preferred_element_type=jnp.float32)
    o_ref[...] = o.astype(o_ref.dtype)


def _round_up(x, m):
    return (x + m - 1) // m * m


def _pad_to(a, shape):
    pads = [(0, t - s) for s, t in zip(a.shape, shape)]
    return jnp.pad(a, pads) if any(p for _, p in pads) else a


def cortex_fusion_forward(x, params, *, tb=512, compute_dtype=jnp.bfloat16):
    """x: (B, input_dim) float32. params: dict w1,b1,w2,b2,w3,b3 (Linear as (in,out))."""
    B, in_dim = x.shape
    H = params["w1"].shape[1]

    LANES = 128
    H_pad = _round_up(H, LANES)     # hidden padded to full lane width
    N_pad = LANES                   # fc3 output padded 1 -> 128 for lane-dense stores

    # Batch tile: as large as possible for MXU/pipeline efficiency, but keep at
    # least 2 grid steps when the batch allows it (v7x megacore sharding).
    tb = min(tb, _round_up(B, 8))
    if B >= 16 and 2 * tb > _round_up(B, 8):
        tb = _round_up(pl.cdiv(B, 2), 8)
    B_pad = _round_up(B, tb)
    grid = (B_pad // tb,)

    # Pad + cast operands. Zero padding is exact: padded hidden units have zero
    # weights and zero bias, so relu(0) = 0 contributes nothing downstream.
    xp = _pad_to(x, (B_pad, in_dim)).astype(compute_dtype)
    w1 = _pad_to(params["w1"], (in_dim, H_pad)).astype(compute_dtype)
    b1 = _pad_to(params["b1"], (1, H_pad)).astype(jnp.float32)
    w2 = _pad_to(params["w2"], (H_pad, H_pad)).astype(compute_dtype)
    b2 = _pad_to(params["b2"], (1, H_pad)).astype(jnp.float32)
    w3 = _pad_to(params["w3"], (H_pad, N_pad)).astype(compute_dtype)
    # b3 is folded into the wrapper-side epilogue add below.

    flops = 2 * B_pad * (in_dim * H_pad + H_pad * H_pad + H_pad * N_pad)
    bytes_accessed = int(
        xp.size * xp.dtype.itemsize
        + sum(a.size * a.dtype.itemsize for a in (w1, b1, w2, b2, w3))
        + B_pad * N_pad * 4)
    cost = pl.CostEstimate(flops=flops, transcendentals=0,
                           bytes_accessed=bytes_accessed)

    full2d = lambda shape: pl.BlockSpec(shape, lambda i: (0, 0))

    out_pad = pl.pallas_call(
        mlp_kernel,
        out_shape=jax.ShapeDtypeStruct((B_pad, N_pad), jnp.float32),
        grid_spec=pltpu.PrefetchScalarGridSpec(
            num_scalar_prefetch=0,
            grid=grid,
            in_specs=[
                pl.BlockSpec((tb, in_dim), lambda i: (i, 0)),   # x tile
                full2d((in_dim, H_pad)),                        # w1 (resident)
                full2d((1, H_pad)),                             # b1
                full2d((H_pad, H_pad)),                         # w2 (resident)
                full2d((1, H_pad)),                             # b2
                full2d((H_pad, N_pad)),                         # w3 (padded cols)
            ],
            out_specs=pl.BlockSpec((tb, N_pad), lambda i: (i, 0)),
        ),
        compiler_params=pltpu.CompilerParams(
            dimension_semantics=("parallel",)),
        cost_estimate=cost,
    )(xp, w1, b1, w2, b2, w3)

    # Layout plumbing: column 0 holds the real fc3 output; add the scalar bias here.
    return out_pad[:B, 0:1] + params["b3"].astype(jnp.float32)


def init_params(key, input_dim=4, hidden_dim=64):
    """Deterministic init mimicking nn.Linear's uniform(-1/sqrt(fan_in), 1/sqrt(fan_in))."""
    ks = jax.random.split(key, 6)

    def linear(kw, kb, fan_in, fan_out):
        bound = 1.0 / jnp.sqrt(fan_in)
        w = jax.random.uniform(kw, (fan_in, fan_out), jnp.float32, -bound, bound)
        b = jax.random.uniform(kb, (1, fan_out), jnp.float32, -bound, bound)
        return w, b

    w1, b1 = linear(ks[0], ks[1], input_dim, hidden_dim)
    w2, b2 = linear(ks[2], ks[3], hidden_dim, hidden_dim)
    w3, b3 = linear(ks[4], ks[5], hidden_dim, 1)
    return {"w1": w1, "b1": b1, "w2": w2, "b2": b2, "w3": w3, "b3": b3}


def reference_forward(x, p, compute_dtype=jnp.bfloat16):
    """Pure-JAX reference using the same bf16-rounded operands as the kernel."""
    c = lambda a: a.astype(compute_dtype).astype(jnp.float32)
    h1 = jnp.maximum(c(x) @ c(p["w1"]) + p["b1"], 0.0)
    h2 = jnp.maximum(c(h1) @ c(p["w2"]) + p["b2"], 0.0)
    return c(h2) @ c(p["w3"]) + p["b3"]


if __name__ == "__main__":
    key = jax.random.PRNGKey(0)
    k_params, k_x = jax.random.split(key)

    input_dim, hidden_dim, batch = 4, 64, 16
    params = init_params(k_params, input_dim, hidden_dim)
    x = jax.random.normal(k_x, (batch, input_dim), jnp.float32)

    out = cortex_fusion_forward(x, params)
    out = jax.block_until_ready(out)

    ref = reference_forward(x, params)
    assert out.shape == (batch, 1)
    assert jnp.allclose(out, ref, atol=1e-4, rtol=1e-4), "mismatch vs pure-JAX reference"

    print("KERNEL_OK")
</pallas_src>

<mosaic_0001>
module attributes {stable_mosaic.version = 11 : i64} {
  func.func @mlp_kernel(%arg0: i32, %arg1: memref<8x4xbf16, #tpu.memory_space<vmem>>, %arg2: memref<4x128xbf16, #tpu.memory_space<vmem>>, %arg3: memref<1x128xf32, #tpu.memory_space<vmem>>, %arg4: memref<128x128xbf16, #tpu.memory_space<vmem>>, %arg5: memref<1x128xf32, #tpu.memory_space<vmem>>, %arg6: memref<128x128xbf16, #tpu.memory_space<vmem>>, %arg7: memref<8x128xf32, #tpu.memory_space<vmem>>) attributes {dimension_semantics = [#tpu.dimension_semantics<parallel>], iteration_bounds = array<i64: 2>, scalar_prefetch = 0 : i64, scratch_operands = 0 : i64, tpu.core_type = #tpu.core_type<tc>, window_params = [{transform_indices = @transform_0, window_bounds = array<i64: 8, 4>}, {pipeline_mode = #tpu.pipeline_mode<synchronous>, transform_indices = @transform_1, window_bounds = array<i64: 4, 128>}, {pipeline_mode = #tpu.pipeline_mode<synchronous>, transform_indices = @transform_2, window_bounds = array<i64: 1, 128>}, {pipeline_mode = #tpu.pipeline_mode<synchronous>, transform_indices = @transform_3, window_bounds = array<i64: 128, 128>}, {pipeline_mode = #tpu.pipeline_mode<synchronous>, transform_indices = @transform_4, window_bounds = array<i64: 1, 128>}, {pipeline_mode = #tpu.pipeline_mode<synchronous>, transform_indices = @transform_5, window_bounds = array<i64: 128, 128>}, {transform_indices = @transform_6, window_bounds = array<i64: 8, 128>}]} {
    %c0 = arith.constant 0 : index
    %c0_0 = arith.constant 0 : index
    %0 = vector.load %arg1[%c0, %c0_0] : memref<8x4xbf16, #tpu.memory_space<vmem>>, vector<8x4xbf16>
    %1 = arith.extf %0 : vector<8x4xbf16> to vector<8x4xf32>
    %c0_1 = arith.constant 0 : index
    %c0_2 = arith.constant 0 : index
    %2 = vector.load %arg2[%c0_1, %c0_2] : memref<4x128xbf16, #tpu.memory_space<vmem>>, vector<4x128xbf16>
    %3 = arith.extf %2 : vector<4x128xbf16> to vector<4x128xf32>
    %4 = vector.extract_strided_slice %1 {offsets = [0, 0], sizes = [8, 1], strides = [1, 1]} : vector<8x4xf32> to vector<8x1xf32>
    %5 = vector.extract_strided_slice %3 {offsets = [0, 0], sizes = [1, 128], strides = [1, 1]} : vector<4x128xf32> to vector<1x128xf32>
    %6 = vector.broadcast %4 : vector<8x1xf32> to vector<8x128xf32>
    %7 = vector.broadcast %5 : vector<1x128xf32> to vector<8x128xf32>
    %8 = arith.mulf %6, %7 : vector<8x128xf32>
    %c0_3 = arith.constant 0 : index
    %c0_4 = arith.constant 0 : index
    %9 = vector.load %arg3[%c0_3, %c0_4] : memref<1x128xf32, #tpu.memory_space<vmem>>, vector<1x128xf32>
    %10 = vector.broadcast %9 : vector<1x128xf32> to vector<8x128xf32>
    %11 = arith.addf %8, %10 : vector<8x128xf32>
    %12 = vector.extract_strided_slice %1 {offsets = [0, 1], sizes = [8, 1], strides = [1, 1]} : vector<8x4xf32> to vector<8x1xf32>
    %13 = vector.extract_strided_slice %3 {offsets = [1, 0], sizes = [1, 128], strides = [1, 1]} : vector<4x128xf32> to vector<1x128xf32>
    %14 = vector.broadcast %12 : vector<8x1xf32> to vector<8x128xf32>
    %15 = vector.broadcast %13 : vector<1x128xf32> to vector<8x128xf32>
    %16 = arith.mulf %14, %15 : vector<8x128xf32>
    %17 = arith.addf %11, %16 : vector<8x128xf32>
    %18 = vector.extract_strided_slice %1 {offsets = [0, 2], sizes = [8, 1], strides = [1, 1]} : vector<8x4xf32> to vector<8x1xf32>
    %19 = vector.extract_strided_slice %3 {offsets = [2, 0], sizes = [1, 128], strides = [1, 1]} : vector<4x128xf32> to vector<1x128xf32>
    %20 = vector.broadcast %18 : vector<8x1xf32> to vector<8x128xf32>
    %21 = vector.broadcast %19 : vector<1x128xf32> to vector<8x128xf32>
    %22 = arith.mulf %20, %21 : vector<8x128xf32>
    %23 = arith.addf %17, %22 : vector<8x128xf32>
    %24 = vector.extract_strided_slice %1 {offsets = [0, 3], sizes = [8, 1], strides = [1, 1]} : vector<8x4xf32> to vector<8x1xf32>
    %25 = vector.extract_strided_slice %3 {offsets = [3, 0], sizes = [1, 128], strides = [1, 1]} : vector<4x128xf32> to vector<1x128xf32>
    %26 = vector.broadcast %24 : vector<8x1xf32> to vector<8x128xf32>
    %27 = vector.broadcast %25 : vector<1x128xf32> to vector<8x128xf32>
    %28 = arith.mulf %26, %27 : vector<8x128xf32>
    %29 = arith.addf %23, %28 : vector<8x128xf32>
    %cst = arith.constant 0.000000e+00 : f32
    %30 = vector.broadcast %cst : f32 to vector<8x128xf32>
    %31 = arith.maximumf %29, %30 : vector<8x128xf32>
    %32 = arith.truncf %31 : vector<8x128xf32> to vector<8x128xbf16>
    %c0_5 = arith.constant 0 : index
    %c0_6 = arith.constant 0 : index
    %33 = vector.load %arg4[%c0_5, %c0_6] : memref<128x128xbf16, #tpu.memory_space<vmem>>, vector<128x128xbf16>
    %cst_7 = arith.constant dense<0.000000e+00> : vector<8x128xf32>
    %34 = tpu.matmul %32, %33, %cst_7 {dimension_numbers = #tpu.dot_dimension_numbers<[1], [0], [0], [1], [0, 0, 1, 1], [], []>} : vector<8x128xbf16>, vector<128x128xbf16>, vector<8x128xf32> -> vector<8x128xf32>
    %c0_8 = arith.constant 0 : index
    %c0_9 = arith.constant 0 : index
    %35 = vector.load %arg5[%c0_8, %c0_9] : memref<1x128xf32, #tpu.memory_space<vmem>>, vector<1x128xf32>
    %36 = vector.broadcast %35 : vector<1x128xf32> to vector<8x128xf32>
    %37 = arith.addf %34, %36 : vector<8x128xf32>
    %cst_10 = arith.constant 0.000000e+00 : f32
    %38 = vector.broadcast %cst_10 : f32 to vector<8x128xf32>
    %39 = arith.maximumf %37, %38 : vector<8x128xf32>
    %40 = arith.truncf %39 : vector<8x128xf32> to vector<8x128xbf16>
    %c0_11 = arith.constant 0 : index
    %c0_12 = arith.constant 0 : index
    %41 = vector.load %arg6[%c0_11, %c0_12] : memref<128x128xbf16, #tpu.memory_space<vmem>>, vector<128x128xbf16>
    %cst_13 = arith.constant dense<0.000000e+00> : vector<8x128xf32>
    %42 = tpu.matmul %40, %41, %cst_13 {dimension_numbers = #tpu.dot_dimension_numbers<[1], [0], [0], [1], [0, 0, 1, 1], [], []>} : vector<8x128xbf16>, vector<128x128xbf16>, vector<8x128xf32> -> vector<8x128xf32>
    %c0_14 = arith.constant 0 : index
    %c0_15 = arith.constant 0 : index
    %43 = vector.load %arg7[%c0_14, %c0_15] : memref<8x128xf32, #tpu.memory_space<vmem>>, vector<8x128xf32>
    tpu.vector_store %arg7[%c0_14, %c0_15], %42 {strides = array<i32>} : memref<8x128xf32, #tpu.memory_space<vmem>>, vector<8x128xf32>,
    return
  }
  func.func @transform_0(%arg0: i32) -> (i32, i32) {
    %c0_i32 = arith.constant 0 : i32
    %c0_i32_0 = arith.constant 0 : i32
    return %arg0, %c0_i32 : i32, i32
  }
  func.func @transform_1(%arg0: i32) -> (i32, i32) {
    %c0_i32 = arith.constant 0 : i32
    %c0_i32_0 = arith.constant 0 : i32
    %c0_i32_1 = arith.constant 0 : i32
    return %c0_i32, %c0_i32_0 : i32, i32
  }
  func.func @transform_2(%arg0: i32) -> (i32, i32) {
    %c0_i32 = arith.constant 0 : i32
    %c0_i32_0 = arith.constant 0 : i32
    %c0_i32_1 = arith.constant 0 : i32
    return %c0_i32, %c0_i32_0 : i32, i32
  }
  func.func @transform_3(%arg0: i32) -> (i32, i32) {
    %c0_i32 = arith.constant 0 : i32
    %c0_i32_0 = arith.constant 0 : i32
    %c0_i32_1 = arith.constant 0 : i32
    return %c0_i32, %c0_i32_0 : i32, i32
  }
  func.func @transform_4(%arg0: i32) -> (i32, i32) {
    %c0_i32 = arith.constant 0 : i32
    %c0_i32_0 = arith.constant 0 : i32
    %c0_i32_1 = arith.constant 0 : i32
    return %c0_i32, %c0_i32_0 : i32, i32
  }
  func.func @transform_5(%arg0: i32) -> (i32, i32) {
    %c0_i32 = arith.constant 0 : i32
    %c0_i32_0 = arith.constant 0 : i32
    %c0_i32_1 = arith.constant 0 : i32
    return %c0_i32, %c0_i32_0 : i32, i32
  }
  func.func @transform_6(%arg0: i32) -> (i32, i32) {
    %c0_i32 = arith.constant 0 : i32
    %c0_i32_0 = arith.constant 0 : i32
    return %arg0, %c0_i32 : i32, i32
  }
}

</mosaic_0001>

<llo_original>
// kernel: tpu_custom_call.1
$region0: #{tpu_custom_call.1}
  #allocation0 [shape = 'u32[]', space=smem, size = 0x4, offset = 0x4, fixed_abs, tag = 'smem constant byte address 0x4 - core index']
  #allocation1 [shape = 'u32[144,128]{1,0:T(1,128)}', space=vmem, size = 0x12000, scoped, tag = 'internal scratch']
  %s0 = inlined_call_operand.vmem [shape: bf16[16,4], index: 0, kind: input, shape index: {}]
  %s1 = inlined_call_operand.vmem [shape: bf16[4,128], index: 1, kind: input, shape index: {}]
  %s2 = inlined_call_operand.vmem [shape: f32[1,128], index: 2, kind: input, shape index: {}]
  %s3 = inlined_call_operand.hbm [shape: bf16[128,128], index: 3, kind: input, shape index: {}]
  %s4 = inlined_call_operand.vmem [shape: f32[1,128], index: 4, kind: input, shape index: {}]
  %s5 = inlined_call_operand.hbm [shape: bf16[128,128], index: 5, kind: input, shape index: {}]
  %s6 = inlined_call_operand.hbm [shape: f32[16,128], index: 6, kind: output, shape index: {}]
  %s7 = sld [smem:[#allocation0]]
  $region65: #{tpu_custom_call.1} parent=0
    _
  %s9 = ssub.s32 1, %s7
  %s10 = scalar_select 0, %s9, %s7
  $region1: #{tpu_custom_call.1} parent=0
    #allocation2 [shape = 'u8[32768]{0}', space=vmem, size = 0x8000, scoped, tag = 'input window, operand 3, single buffered']
    #allocation3 [shape = 's32[2]{0}', space=sflag, size = 0x8, scoped, tag = 'scoped memory for tpu_custom_call.1']
    #allocation4 [shape = 's32[2]{0}', space=sflag, size = 0x8, scoped, tag = 'scoped memory for tpu_custom_call.1']
    #allocation5 [shape = 'u8[32768]{0}', space=vmem, size = 0x8000, scoped, tag = 'input window, operand 5, single buffered']
    #allocation6 [shape = 's32[1]{0}', space=sflag, size = 0x4, scoped, tag = 'scoped memory for tpu_custom_call.1']
    #allocation7 [shape = 'u8[8192]{0}', space=vmem, size = 0x2000, scoped, tag = 'output window, operand 0']
    %11 = vsyncpa [#allocation3], 0
    %12 = vsyncpa [#allocation6], 0
    %13 = vsyncpa [#allocation4], 0
    %s14 = scalar_lea.sflag [#allocation4], 1
    %15 = vsyncpa %s14, 0
    loop: start=0, step=1, limit=4
    $region2: #{tpu_custom_call.1} parent=1 // loop_pre_header
      _
    $region3: #{tpu_custom_call.1} parent=1 // loop_header
      %s17 = sphi 0, %s21
      %p18 = scmp.ge.s32.totalorder %s17, 4
      %s27 = sphi 0, %s29
      %s30 = sphi 0, %s27
      %s31 = sphi 0, %s30
      %s47 = sphi 0, %s31
      %s51 = sphi 0, %s51
      %s53 = sphi 0, %s51
      %s54 = sphi 0, %s53
      %s68 = sphi 0, %s54
      %s72 = sphi 0, %s72
      %s74 = sphi 0, %s72
      %s75 = sphi 0, %s74
      %s89 = sphi 0, %s75
      %s93 = sphi 0, %s93
      %s95 = sphi 0, %s93
      %s96 = sphi 0, %s95
      %s110 = sphi 0, %s96
      %s114 = sphi 0, %s114
      %s116 = sphi 0, %s114
      %s117 = sphi 0, %s116
      %s131 = sphi 0, %s117
      %s135 = sphi 0, %s135
      %s137 = sphi 0, %s135
      %s138 = sphi 0, %s137
      %s152 = sphi 0, %s138
      %s158 = sphi 0, %s160
      %s161 = sphi 0, %s158
      %s162 = sphi 0, %s161
      %s178 = sphi 0, %s162
    $region4: #{tpu_custom_call.1} parent=1 // loop_header_branch
      %20 = sbr.rel (%p18) target = $region8
    $region5: #{tpu_custom_call.1} parent=1 // loop_body
      %s22 = ssub.s32 %s17, 1
      %s23 = ssub.s32 %s17, 2
      %s24 = sadd.s32 %s17, 1
      %s25 = ssub.s32 %s17, %s24
      %p26 = scmp.eq.s32.totalorder %s25, 0
      %s28 = sadd.s32 %s27, 1
      %s29 = scalar_select %p26, %s27, %s28
      %p32 = pneg %p26
      %p33 = scmp.eq.s32.totalorder %s17, 1
      %p34 = por %p32, %p33
      %p35 = scmp.ne.s32.totalorder %s27, %s30
      %p36 = scmp.eq.s32.totalorder %s17, 0
      %p37 = por %p35, %p36
      %p38 = scmp.ne.s32.totalorder %s27, %s30
      %p39 = scmp.eq.s32.totalorder %s22, 1
      %p40 = por %p38, %p39
      %p41 = scmp.ne.s32.totalorder %s30, %s31
      %p42 = scmp.eq.s32.totalorder %s22, 0
      %p43 = por %p41, %p42
      %p44 = scmp.ne.s32.totalorder %s30, %s31
      %p45 = scmp.eq.s32.totalorder %s23, 1
      %p46 = por %p44, %p45
      %p48 = scmp.ne.s32.totalorder %s31, %s47
      %p49 = scmp.eq.s32.totalorder %s23, 0
      %p50 = por %p48, %p49
      %s52 = sadd.s32 %s51, 1
      %p55 = scmp.eq.s32.totalorder %s17, 1
      %p56 = scmp.ne.s32.totalorder %s51, %s53
      %p57 = scmp.eq.s32.totalorder %s17, 0
      %p58 = por %p56, %p57
      %p59 = scmp.ne.s32.totalorder %s51, %s53
      %p60 = scmp.eq.s32.totalorder %s22, 1
      %p61 = por %p59, %p60
      %p62 = scmp.ne.s32.totalorder %s53, %s54
      %p63 = scmp.eq.s32.totalorder %s22, 0
      %p64 = por %p62, %p63
      %p65 = scmp.ne.s32.totalorder %s53, %s54
      %p66 = scmp.eq.s32.totalorder %s23, 1
      %p67 = por %p65, %p66
      %p69 = scmp.ne.s32.totalorder %s54, %s68
      %p70 = scmp.eq.s32.totalorder %s23, 0
      %p71 = por %p69, %p70
      %s73 = sadd.s32 %s72, 1
      %p76 = scmp.eq.s32.totalorder %s17, 1
      %p77 = scmp.ne.s32.totalorder %s72, %s74
      %p78 = scmp.eq.s32.totalorder %s17, 0
      %p79 = por %p77, %p78
      %p80 = scmp.ne.s32.totalorder %s72, %s74
      %p81 = scmp.eq.s32.totalorder %s22, 1
      %p82 = por %p80, %p81
      %p83 = scmp.ne.s32.totalorder %s74, %s75
      %p84 = scmp.eq.s32.totalorder %s22, 0
      %p85 = por %p83, %p84
      %p86 = scmp.ne.s32.totalorder %s74, %s75
      %p87 = scmp.eq.s32.totalorder %s23, 1
      %p88 = por %p86, %p87
      %p90 = scmp.ne.s32.totalorder %s75, %s89
      %p91 = scmp.eq.s32.totalorder %s23, 0
      %p92 = por %p90, %p91
      %s94 = sadd.s32 %s93, 1
      %p97 = scmp.eq.s32.totalorder %s17, 1
      %p98 = scmp.ne.s32.totalorder %s93, %s95
      %p99 = scmp.eq.s32.totalorder %s17, 0
      %p100 = por %p98, %p99
      %p101 = scmp.ne.s32.totalorder %s93, %s95
      %p102 = scmp.eq.s32.totalorder %s22, 1
      %p103 = por %p101, %p102
      %p104 = scmp.ne.s32.totalorder %s95, %s96
      %p105 = scmp.eq.s32.totalorder %s22, 0
      %p106 = por %p104, %p105
      %p107 = scmp.ne.s32.totalorder %s95, %s96
      %p108 = scmp.eq.s32.totalorder %s23, 1
      %p109 = por %p107, %p108
      %p111 = scmp.ne.s32.totalorder %s96, %s110
      %p112 = scmp.eq.s32.totalorder %s23, 0
      %p113 = por %p111, %p112
      %s115 = sadd.s32 %s114, 1
      %p118 = scmp.eq.s32.totalorder %s17, 1
      %p119 = scmp.ne.s32.totalorder %s114, %s116
      %p120 = scmp.eq.s32.totalorder %s17, 0
      %p121 = por %p119, %p120
      %p122 = scmp.ne.s32.totalorder %s114, %s116
      %p123 = scmp.eq.s32.totalorder %s22, 1
      %p124 = por %p122, %p123
      %p125 = scmp.ne.s32.totalorder %s116, %s117
      %p126 = scmp.eq.s32.totalorder %s22, 0
      %p127 = por %p125, %p126
      %p128 = scmp.ne.s32.totalorder %s116, %s117
      %p129 = scmp.eq.s32.totalorder %s23, 1
      %p130 = por %p128, %p129
      %p132 = scmp.ne.s32.totalorder %s117, %s131
      %p133 = scmp.eq.s32.totalorder %s23, 0
      %p134 = por %p132, %p133
      %s136 = sadd.s32 %s135, 1
      %p139 = scmp.eq.s32.totalorder %s17, 1
      %p140 = scmp.ne.s32.totalorder %s135, %s137
      %p141 = scmp.eq.s32.totalorder %s17, 0
      %p142 = por %p140, %p141
      %p143 = scmp.ne.s32.totalorder %s135, %s137
      %p144 = scmp.eq.s32.totalorder %s22, 1
      %p145 = por %p143, %p144
      %p146 = scmp.ne.s32.totalorder %s137, %s138
      %p147 = scmp.eq.s32.totalorder %s22, 0
      %p148 = por %p146, %p147
      %p149 = scmp.ne.s32.totalorder %s137, %s138
      %p150 = scmp.eq.s32.totalorder %s23, 1
      %p151 = por %p149, %p150
      %p153 = scmp.ne.s32.totalorder %s138, %s152
      %p154 = scmp.eq.s32.totalorder %s23, 0
      %p155 = por %p153, %p154
      %s156 = ssub.s32 %s17, %s24
      %p157 = scmp.eq.s32.totalorder %s156, 0
      %s159 = sadd.s32 %s158, 1
      %s160 = scalar_select %p157, %s158, %s159
      %p163 = pneg %p157
      %p164 = scmp.eq.s32.totalorder %s17, 1
      %p165 = por %p163, %p164
      %p166 = scmp.ne.s32.totalorder %s158, %s161
      %p167 = scmp.eq.s32.totalorder %s17, 0
      %p168 = por %p166, %p167
      %p169 = scmp.ne.s32.totalorder %s158, %s161
      %p170 = scmp.eq.s32.totalorder %s22, 1
      %p171 = por %p169, %p170
      %p172 = scmp.ne.s32.totalorder %s161, %s162
      %p173 = scmp.eq.s32.totalorder %s22, 0
      %p174 = por %p172, %p173
      %p175 = scmp.ne.s32.totalorder %s161, %s162
      %p176 = scmp.eq.s32.totalorder %s23, 1
      %p177 = por %p175, %p176
      %p179 = scmp.ne.s32.totalorder %s162, %s178
      %p180 = scmp.eq.s32.totalorder %s23, 0
      %p181 = por %p179, %p180
      %p182 = scmp.le.s32.totalorder 1, %s17
      %p183 = scmp.lt.s32.totalorder %s17, 3
      %p184 = pnand %p182, %p183
      %p185 = pneg %p184
      // Predicated region
      $region9: #{tpu_custom_call.1} parent=5 // pred_check
        _
      $region10: #{tpu_custom_call.1} parent=5 // pred_check_branch
        %187 = sbr.rel (%p184) target = $region12
      $region11: #{tpu_custom_call.1} parent=5 // pred_region
        %s188 = ssub.s32 %s17, 1
        // Predicated region
        $region13: #{tpu_custom_call.1} parent=11 // pred_check
          %p189 = pneg %p64
        $region14: #{tpu_custom_call.1} parent=11 // pred_check_branch
          %191 = sbr.rel (%p189) target = $region16
        $region15: #{tpu_custom_call.1} parent=11 // pred_region
          _
        $region16: #{tpu_custom_call.1} parent=11 // pred_fallthru
          _
        // Predicated region
        $region17: #{tpu_custom_call.1} parent=11 // pred_check
          %p192 = pneg %p85
        $region18: #{tpu_custom_call.1} parent=11 // pred_check_branch
          %194 = sbr.rel (%p192) target = $region20
        $region19: #{tpu_custom_call.1} parent=11 // pred_region
          _
        $region20: #{tpu_custom_call.1} parent=11 // pred_fallthru
          _
        // Predicated region
        $region21: #{tpu_custom_call.1} parent=11 // pred_check
          %p195 = pneg %p106
        $region22: #{tpu_custom_call.1} parent=11 // pred_check_branch
          %197 = sbr.rel (%p195) target = $region24
        $region23: #{tpu_custom_call.1} parent=11 // pred_region
          %s199 = ssub.s32 1024, 1024
          %200 = vsyncadd [#allocation3], %s199
          %s201 = sshll.u32 [#allocation2], 4
          %s202 = int_to_ptr.vmem [resolvable:$true] %s201
          %207 = dma.hbm_to_vmem [thread:$0]  %s3, 1024, %s202, [#allocation3], 64, 64, 4
        $region24: #{tpu_custom_call.1} parent=11 // pred_fallthru
          _
        // Predicated region
        $region25: #{tpu_custom_call.1} parent=11 // pred_check
          %p208 = pneg %p127
        $region26: #{tpu_custom_call.1} parent=11 // pred_check_branch
          %210 = sbr.rel (%p208) target = $region28
        $region27: #{tpu_custom_call.1} parent=11 // pred_region
          _
        $region28: #{tpu_custom_call.1} parent=11 // pred_fallthru
          _
        // Predicated region
        $region29: #{tpu_custom_call.1} parent=11 // pred_check
          %p211 = pneg %p148
        $region30: #{tpu_custom_call.1} parent=11 // pred_check_branch
          %213 = sbr.rel (%p211) target = $region32
        $region31: #{tpu_custom_call.1} parent=11 // pred_region
          %s215 = ssub.s32 1024, 1024
          %216 = vsyncadd [#allocation6], %s215
          %s217 = sshll.u32 [#allocation5], 4
          %s218 = int_to_ptr.vmem [resolvable:$true] %s217
          %223 = dma.hbm_to_vmem [thread:$0]  %s5, 1024, %s218, [#allocation6], 64, 64, 4
        $region32: #{tpu_custom_call.1} parent=11 // pred_fallthru
          _
      $region12: #{tpu_custom_call.1} parent=5 // pred_fallthru
        _
      %p224 = scmp.lt.s32.totalorder %s17, 2
      // Predicated region
      $region33: #{tpu_custom_call.1} parent=5 // pred_check
        %p225 = pneg %p224
      $region34: #{tpu_custom_call.1} parent=5 // pred_check_branch
        %227 = sbr.rel (%p225) target = $region36
      $region35: #{tpu_custom_call.1} parent=5 // pred_region
        // Predicated region
        $region37: #{tpu_custom_call.1} parent=35 // pred_check
          %p228 = pneg %p37
        $region38: #{tpu_custom_call.1} parent=35 // pred_check_branch
          %230 = sbr.rel (%p228) target = $region40
        $region39: #{tpu_custom_call.1} parent=35 // pred_region
          %p231 = scmp.lt.s32.totalorder %s17, 1
          %s232 = scalar_select %p231, %s17, 1
          %s233 = smul.addr %s232, 4
          %s234 = scalar_lea.vmem %s0, %s233
        $region40: #{tpu_custom_call.1} parent=35 // pred_fallthru
          _
      $region36: #{tpu_custom_call.1} parent=5 // pred_fallthru
        _
      %p235 = scmp.le.s32.totalorder 1, %s17
      %p236 = scmp.lt.s32.totalorder %s17, 3
      %p237 = pnand %p235, %p236
      %p238 = pneg %p237
      // Predicated region
      $region41: #{tpu_custom_call.1} parent=5 // pred_check
        _
      $region42: #{tpu_custom_call.1} parent=5 // pred_check_branch
        %240 = sbr.rel (%p237) target = $region44
      $region43: #{tpu_custom_call.1} parent=5 // pred_region
        %s241 = ssub.s32 %s17, 1
        // Predicated region
        $region45: #{tpu_custom_call.1} parent=43 // pred_check
          %p242 = pneg %p106
        $region46: #{tpu_custom_call.1} parent=43 // pred_check_branch
          %244 = sbr.rel (%p242) target = $region48
        $region47: #{tpu_custom_call.1} parent=43 // pred_region
          %245 = dma.done [#allocation3], 1024
        $region48: #{tpu_custom_call.1} parent=43 // pred_fallthru
          _
        // Predicated region
        $region49: #{tpu_custom_call.1} parent=43 // pred_check
          %p246 = pneg %p148
        $region50: #{tpu_custom_call.1} parent=43 // pred_check_branch
          %248 = sbr.rel (%p246) target = $region52
        $region51: #{tpu_custom_call.1} parent=43 // pred_region
          %249 = dma.done [#allocation6], 1024
        $region52: #{tpu_custom_call.1} parent=43 // pred_fallthru
          _
        %p250 = scmp.lt.s32.totalorder %s22, 1
        %s251 = scalar_select %p250, %s22, 1
        %s252 = smul.addr %s251, 4
        %s253 = scalar_lea.vmem %s0, %s252
        %p254 = pneg %p43
        %p255 = pneg %p40
        %p256 = pneg %p64
        %p257 = pneg %p61
        %p258 = pneg %p85
        %p259 = pneg %p82
        %p260 = pneg %p106
        %p261 = pneg %p103
        %p262 = pneg %p127
        %p263 = pneg %p124
        %p264 = pneg %p148
        %p265 = pneg %p145
        %p266 = pneg %p174
        %p267 = pneg %p171
        %s268 = sand.u32 %s161, 1
        %s269 = scalar_lea.sflag [#allocation4], %s268
        %s270 = sand.u32 %s161, 1
        %s271 = smul.addr %s270, 8
        %s272 = scalar_lea.vmem [#allocation7], %s271
        %p273 = scmp.lt.s32.totalorder %s22, 1
        %s274 = scalar_select %p273, %s22, 1
        %s275 = smul.addr %s274, 4
        %s276 = scalar_lea.vmem %s0, %s275
        %v278 = vld [vmem:[%s276] sm:$0xf]
        %v279 = vunpack.c.l.bf16 %v278
        %v280 = vld [vmem:[%s1] sm:$0x3]
        %v281 = vunpack.c.l.bf16 %v280
        %283 = vset.pattern.permute.xlu0 0
        %284 = vperm.xlu0 %283, %v279
        %v285 = vpop.permute.xlu0 %284
        %v287 = vlaneseq
        %v288 = vshrl.u32 %v287, 7
        %v289 = vsub.s32 0, %v288
        %v290 = vrot.slane %v281, %v289
        %v291 = vmul.f32 %v285, %v290
        %v292 = vld [vmem:[%s2] sm:$0x1]
        %v294 = vlaneseq
        %v295 = vshrl.u32 %v294, 7
        %v296 = vsub.s32 0, %v295
        %v297 = vrot.slane %v292, %v296
        %v299 = vadd.f32 %v291, %v297
        %300 = vset.pattern.permute.xlu0 1
        %301 = vperm.xlu0 %300, %v279
        %v302 = vpop.permute.xlu0 %301
        %v304 = vlaneseq
        %v305 = vshrl.u32 %v304, 7
        %v306 = vsub.s32 1, %v305
        %v307 = vrot.slane %v281, %v306
        %v308 = vmul.f32 %v302, %v307
        %v309 = vadd.f32 %v299, %v308
        %310 = vset.pattern.permute.xlu0 2
        %311 = vperm.xlu0 %310, %v279
        %v312 = vpop.permute.xlu0 %311
        %v314 = vlaneseq
        %v315 = vshrl.u32 %v314, 7
        %v316 = vsub.s32 2, %v315
        %v317 = vrot.slane %v281, %v316
        %v318 = vmul.f32 %v312, %v317
        %v319 = vadd.f32 %v309, %v318
        %320 = vset.pattern.permute.xlu0 3
        %321 = vperm.xlu0 %320, %v279
        %v322 = vpop.permute.xlu0 %321
        %v324 = vlaneseq
        %v325 = vshrl.u32 %v324, 7
        %v326 = vsub.s32 3, %v325
        %v327 = vrot.slane %v281, %v326
        %v328 = vmul.f32 %v322, %v327
        %v329 = vadd.f32 %v319, %v328
        %v330 = vmax.f32 %v329, 0.0
        %v331 = vpack.c.bf16 %v330, %v330
        %v332 = vld [vmem:[#allocation2] sm:$0xf]
        %v333 = vld [vmem:[#allocation2 + $0x4] sm:$0xf]
        %v334 = vld [vmem:[#allocation2 + $0x8] sm:$0xf]
        %v335 = vld [vmem:[#allocation2 + $0xc] sm:$0xf]
        %v336 = vld [vmem:[#allocation2 + $0x10] sm:$0xf]
        %v337 = vld [vmem:[#allocation2 + $0x14] sm:$0xf]
        %v338 = vld [vmem:[#allocation2 + $0x18] sm:$0xf]
        %v339 = vld [vmem:[#allocation2 + $0x1c] sm:$0xf]
        %v340 = vld [vmem:[#allocation2 + $0x20] sm:$0xf]
        %v341 = vld [vmem:[#allocation2 + $0x24] sm:$0xf]
        %v342 = vld [vmem:[#allocation2 + $0x28] sm:$0xf]
        %v343 = vld [vmem:[#allocation2 + $0x2c] sm:$0xf]
        %v344 = vld [vmem:[#allocation2 + $0x30] sm:$0xf]
        %v345 = vld [vmem:[#allocation2 + $0x34] sm:$0xf]
        %v346 = vld [vmem:[#allocation2 + $0x38] sm:$0xf]
        %v347 = vld [vmem:[#allocation2 + $0x3c] sm:$0xf]
        %v348 = vld [vmem:[%s4] sm:$0x1]
        %v350 = vlaneseq
        %v351 = vshrl.u32 %v350, 7
        %v352 = vsub.s32 0, %v351
        %v353 = vrot.slane %v348, %v352
        %v371 = vunpack.c.l.b16 %v332
        %v372 = vunpack.c.l.b16 %v333
        %v373 = vunpack.c.l.b16 %v334
        %v374 = vunpack.c.l.b16 %v335
        %v375 = vunpack.c.l.b16 %v336
        %v376 = vunpack.c.l.b16 %v337
        %v377 = vunpack.c.l.b16 %v338
        %v378 = vunpack.c.l.b16 %v339
        %v379 = vunpack.c.l.b16 %v340
        %v380 = vunpack.c.l.b16 %v341
        %v381 = vunpack.c.l.b16 %v342
        %v382 = vunpack.c.l.b16 %v343
        %v383 = vunpack.c.l.b16 %v344
        %v384 = vunpack.c.l.b16 %v345
        %v385 = vunpack.c.l.b16 %v346
        %v386 = vunpack.c.l.b16 %v347
        %v387 = vpack.c.b16 %v372, %v371
        %v388 = vpack.c.b16 %v374, %v373
        %v389 = vpack.c.b16 %v376, %v375
        %v390 = vpack.c.b16 %v378, %v377
        %v391 = vpack.c.b16 %v380, %v379
        %v392 = vpack.c.b16 %v382, %v381
        %v393 = vpack.c.b16 %v384, %v383
        %v394 = vpack.c.b16 %v386, %v385
        %403 = vmatprep.subr.bf16.mxu0 0
        %404 = vmatpush1.bf16.msra.mxu0 %v387
        %405 = vmatprep.subr.bf16.mxu0 0
        %406 = vmatpush1.bf16.msra.mxu0 %v388
        %407 = vmatprep.subr.bf16.mxu0 0
        %408 = vmatpush1.bf16.msra.mxu0 %v389
        %409 = vmatprep.subr.bf16.mxu0 0
        %410 = vmatpush1.bf16.msra.mxu0 %v390
        %411 = vmatprep.subr.bf16.mxu0 0
        %412 = vmatpush1.bf16.msra.mxu0 %v391
        %413 = vmatprep.subr.bf16.mxu0 0
        %414 = vmatpush1.bf16.msra.mxu0 %v392
        %415 = vmatprep.subr.bf16.mxu0 0
        %416 = vmatpush1.bf16.msra.mxu0 %v393
        %417 = vmatprep.subr.bf16.mxu0 0
        %418 = vmatpush1.bf16.msra.mxu0 %v394
        %419 = vmatprep.subr.bf16.mxu0 0
        %420 = vmatpush1.bf16.msra.mxu0 0
        %421 = vmatprep.subr.bf16.mxu0 0
        %422 = vmatpush1.bf16.msra.mxu0 0
        %423 = vmatprep.subr.bf16.mxu0 0
        %424 = vmatpush1.bf16.msra.mxu0 0
        %425 = vmatprep.subr.bf16.mxu0 0
        %426 = vmatpush1.bf16.msra.mxu0 0
        %427 = vmatprep.subr.bf16.mxu0 0
        %428 = vmatpush1.bf16.msra.mxu0 0
        %429 = vmatprep.subr.bf16.mxu0 0
        %430 = vmatpush1.bf16.msra.mxu0 0
        %431 = vmatprep.subr.bf16.mxu0 0
        %432 = vmatpush1.bf16.msra.mxu0 0
        %433 = vmatprep.subr.bf16.mxu0 0
        %434 = vmatpush1.bf16.msra.mxu0 0
        %435 = vmatprep.mubr.bf16.mxu0 0
        %436 = vmatmul.mubr.bf16.gmra.mrb[0].mxu0 %v331
        %v437 = vpop.f32.mrb[0].mxu0
        %v438 = vadd.f32 %v353, %v437
        %v439 = vpop.f32.mrb[0].mxu0
        %v440 = vpop.f32.mrb[0].mxu0
        %v441 = vpop.f32.mrb[0].mxu0
        %442 = vdwg.mxu0
        %v443 = vmax.f32 %v438, 0.0
        %v444 = vpack.c.bf16 %v443, %v443
        %v445 = vld [vmem:[#allocation5] sm:$0xf]
        %v446 = vld [vmem:[#allocation5 + $0x4] sm:$0xf]
        %v447 = vld [vmem:[#allocation5 + $0x8] sm:$0xf]
        %v448 = vld [vmem:[#allocation5 + $0xc] sm:$0xf]
        %v449 = vld [vmem:[#allocation5 + $0x10] sm:$0xf]
        %v450 = vld [vmem:[#allocation5 + $0x14] sm:$0xf]
        %v451 = vld [vmem:[#allocation5 + $0x18] sm:$0xf]
        %v452 = vld [vmem:[#allocation5 + $0x1c] sm:$0xf]
        %v453 = vld [vmem:[#allocation5 + $0x20] sm:$0xf]
        %v454 = vld [vmem:[#allocation5 + $0x24] sm:$0xf]
        %v455 = vld [vmem:[#allocation5 + $0x28] sm:$0xf]
        %v456 = vld [vmem:[#allocation5 + $0x2c] sm:$0xf]
        %v457 = vld [vmem:[#allocation5 + $0x30] sm:$0xf]
        %v458 = vld [vmem:[#allocation5 + $0x34] sm:$0xf]
        %v459 = vld [vmem:[#allocation5 + $0x38] sm:$0xf]
        %v460 = vld [vmem:[#allocation5 + $0x3c] sm:$0xf]
        %v477 = vunpack.c.l.b16 %v445
        %v478 = vunpack.c.l.b16 %v446
        %v479 = vunpack.c.l.b16 %v447
        %v480 = vunpack.c.l.b16 %v448
        %v481 = vunpack.c.l.b16 %v449
        %v482 = vunpack.c.l.b16 %v450
        %v483 = vunpack.c.l.b16 %v451
        %v484 = vunpack.c.l.b16 %v452
        %v485 = vunpack.c.l.b16 %v453
        %v486 = vunpack.c.l.b16 %v454
        %v487 = vunpack.c.l.b16 %v455
        %v488 = vunpack.c.l.b16 %v456
        %v489 = vunpack.c.l.b16 %v457
        %v490 = vunpack.c.l.b16 %v458
        %v491 = vunpack.c.l.b16 %v459
        %v492 = vunpack.c.l.b16 %v460
        %v493 = vpack.c.b16 %v478, %v477
        %v494 = vpack.c.b16 %v480, %v479
        %v495 = vpack.c.b16 %v482, %v481
        %v496 = vpack.c.b16 %v484, %v483
        %v497 = vpack.c.b16 %v486, %v485
        %v498 = vpack.c.b16 %v488, %v487
        %v499 = vpack.c.b16 %v490, %v489
        %v500 = vpack.c.b16 %v492, %v491
        %509 = vmatprep.subr.bf16.mxu0 0
        %510 = vmatpush1.bf16.msra.mxu0 %v493
        %511 = vmatprep.subr.bf16.mxu0 0
        %512 = vmatpush1.bf16.msra.mxu0 %v494
        %513 = vmatprep.subr.bf16.mxu0 0
        %514 = vmatpush1.bf16.msra.mxu0 %v495
        %515 = vmatprep.subr.bf16.mxu0 0
        %516 = vmatpush1.bf16.msra.mxu0 %v496
        %517 = vmatprep.subr.bf16.mxu0 0
        %518 = vmatpush1.bf16.msra.mxu0 %v497
        %519 = vmatprep.subr.bf16.mxu0 0
        %520 = vmatpush1.bf16.msra.mxu0 %v498
        %521 = vmatprep.subr.bf16.mxu0 0
        %522 = vmatpush1.bf16.msra.mxu0 %v499
        %523 = vmatprep.subr.bf16.mxu0 0
        %524 = vmatpush1.bf16.msra.mxu0 %v500
        %525 = vmatprep.subr.bf16.mxu0 0
        %526 = vmatpush1.bf16.msra.mxu0 0
        %527 = vmatprep.subr.bf16.mxu0 0
        %528 = vmatpush1.bf16.msra.mxu0 0
        %529 = vmatprep.subr.bf16.mxu0 0
        %530 = vmatpush1.bf16.msra.mxu0 0
        %531 = vmatprep.subr.bf16.mxu0 0
        %532 = vmatpush1.bf16.msra.mxu0 0
        %533 = vmatprep.subr.bf16.mxu0 0
        %534 = vmatpush1.bf16.msra.mxu0 0
        %535 = vmatprep.subr.bf16.mxu0 0
        %536 = vmatpush1.bf16.msra.mxu0 0
        %537 = vmatprep.subr.bf16.mxu0 0
        %538 = vmatpush1.bf16.msra.mxu0 0
        %539 = vmatprep.subr.bf16.mxu0 0
        %540 = vmatpush1.bf16.msra.mxu0 0
        %541 = vmatprep.mubr.bf16.mxu0 0
        %542 = vmatmul.mubr.bf16.gmra.mrb[0].mxu0 %v444
        %v543 = vpop.f32.mrb[0].mxu0
        %v544 = vadd.f32 0.0, %v543
        %v545 = vpop.f32.mrb[0].mxu0
        %v546 = vpop.f32.mrb[0].mxu0
        %v547 = vpop.f32.mrb[0].mxu0
        %548 = vdwg.mxu0
        %549 = vst [vmem:[%s272] sm:$0xff] %v544
        %s550 = sand.u32 %s161, 1
        %s551 = scalar_lea.sflag [#allocation4], %s550
        %s552 = sand.u32 %s161, 1
        %s553 = smul.addr %s552, 8
        %s554 = scalar_lea.vmem [#allocation7], %s553
        // Predicated region
        $region53: #{tpu_custom_call.1} parent=43 // pred_check
          %p555 = pneg %p171
        $region54: #{tpu_custom_call.1} parent=43 // pred_check_branch
          %557 = sbr.rel (%p555) target = $region56
        $region55: #{tpu_custom_call.1} parent=43 // pred_region
          %s559 = ssub.s32 128, 128
          %560 = vsyncadd %s551, %s559
          %s561 = smul.addr %s22, 128
          %s562 = scalar_lea.hbm %s6, %s561
          %s564 = sshll.u32 %s554, 4
          %s565 = int_to_ptr.vmem [resolvable:$true] %s564
          %567 = dma.vmem_to_hbm [thread:$0]  %s565, 128, %s562, %s551
        $region56: #{tpu_custom_call.1} parent=43 // pred_fallthru
          _
      $region44: #{tpu_custom_call.1} parent=5 // pred_fallthru
        _
      %p568 = scmp.le.s32.totalorder 2, %s17
      // Predicated region
      $region57: #{tpu_custom_call.1} parent=5 // pred_check
        %p569 = pneg %p568
      $region58: #{tpu_custom_call.1} parent=5 // pred_check_branch
        %571 = sbr.rel (%p569) target = $region60
      $region59: #{tpu_custom_call.1} parent=5 // pred_region
        %s572 = ssub.s32 %s17, 2
        // Predicated region
        $region61: #{tpu_custom_call.1} parent=59 // pred_check
          %p573 = pneg %p177
        $region62: #{tpu_custom_call.1} parent=59 // pred_check_branch
          %575 = sbr.rel (%p573) target = $region64
        $region63: #{tpu_custom_call.1} parent=59 // pred_region
          %s576 = sand.u32 %s162, 1
          %s577 = scalar_lea.sflag [#allocation4], %s576
          %s578 = sand.u32 %s162, 1
          %s579 = smul.addr %s578, 8
          %s580 = scalar_lea.vmem [#allocation7], %s579
          %581 = dma.done %s577, 128
        $region64: #{tpu_custom_call.1} parent=59 // pred_fallthru
          _
      $region60: #{tpu_custom_call.1} parent=5 // pred_fallthru
        _
    $region6: #{tpu_custom_call.1} parent=1 // loop_footer
      %s21 = sadd.s32 1, %s17
    $region7: #{tpu_custom_call.1} parent=1 // loop_footer_branch
      %16 = sbr.rel target = $region3
    $region8: #{tpu_custom_call.1} parent=1 // loop_exit
      _
    %582 = vsyncpa [#allocation3], 1
    %s583 = scalar_lea.sflag [#allocation3], 1
    %584 = vsyncpa %s583, 1
    %585 = vsyncpa [#allocation6], 1
    %586 = vsyncpa [#allocation4], 1
    %s587 = scalar_lea.sflag [#allocation4], 1
    %588 = vsyncpa %s587, 1

</llo_original>
